<compile_context>
chip_gen: v6e
topology: v6e:2x2x1
jax: 0.10.0
libtpu: 0.0.40
codegen_flags: <defaults>
</compile_context>

<pallas_src>
import jax
import jax.numpy as jnp
from jax.experimental import pallas as pl
from jax.experimental.pallas import tpu as pltpu


def _round_up(x, m):
    return (x + m - 1) // m * m


def _default_lane_pack():
    """R rows folded into the lane axis: 16 fills 128 lanes for O=4 on
    v6e/v7x; v5e's smaller/slower MXU prefers less block-diag zero work."""
    try:
        kind = jax.devices()[0].device_kind.lower()
    except Exception:
        return 16
    if "v5 lite" in kind or "v5lite" in kind or "v5e" in kind:
        return 8
    return 16


def _mlp_kernel(x1_ref, x2_ref, w1a_ref, w1b_ref, b1_ref, w3_ref, b3_ref,
                packed_ref):
    # ---- layer 1: fused concat, lane-packed, bf16-in / f32-accumulate -------
    x1 = x1_ref[...].astype(jnp.bfloat16)                      # [T, d1*R]
    x2 = x2_ref[...].astype(jnp.bfloat16)                      # [T, d2*R]
    lin1 = (jnp.dot(x1, w1a_ref[...], preferred_element_type=jnp.float32)
            + jnp.dot(x2, w1b_ref[...], preferred_element_type=jnp.float32)
            + b1_ref[...])                                     # [T, H*R] f32
    # sigmoid(x) == 0.5*tanh(0.5*x) + 0.5  (one EUP push, no VPU divide)
    out1 = 0.5 * jnp.tanh(0.5 * lin1) + 0.5

    # ---- layer 2 -------------------------------------------------------------
    lin3 = jnp.dot(out1.astype(jnp.bfloat16), w3_ref[...],
                   preferred_element_type=jnp.float32) + b3_ref[...]  # [T, O*R]
    out = 0.5 * jnp.tanh(0.5 * lin3) + 0.5

    # Single lane-dense store: [ output (all R groups) | linear3 (all R groups) ]
    packed_ref[...] = jnp.concatenate([out, lin3], axis=-1).astype(
        packed_ref.dtype)


def mlp_forward(inputs, inputs_demoips, w1_t, b1, w3_t, b3, *,
                tile_b=32768, lane_pack=None):
    """inputs: [B, d1], inputs_demoips: [B, d2]; w1_t: [d1+d2, H], b1: [1, H];
    w3_t: [H, O], b3: [1, O]. Returns (output, linear3), both [B, O] f32.

    tile_b    : target number of ORIGINAL batch rows per grid step.
    lane_pack : rows folded into the 128-lane axis (R); default per chip.
    """
    B, d1 = inputs.shape
    d2 = inputs_demoips.shape[1]
    H = w1_t.shape[1]
    O = w3_t.shape[1]

    R = int(lane_pack) if lane_pack is not None else _default_lane_pack()
    R = max(1, R)

    # Pad batch to a multiple of R only if needed (<= R-1 rows, cheap); the
    # grid itself handles ragged tails via Pallas masking (no full-tile pad).
    Bpad = _round_up(B, R)
    if Bpad != B:
        pad = Bpad - B
        inputs = jnp.pad(inputs, ((0, pad), (0, 0)))
        inputs_demoips = jnp.pad(inputs_demoips, ((0, pad), (0, 0)))

    Rg = Bpad // R  # number of lane-packed row groups

    # Lane-packed activation views: free row-major reshapes (no data movement).
    x1p = inputs.reshape(Rg, d1 * R)
    x2p = inputs_demoips.reshape(Rg, d2 * R)

    # Block-diagonal weight replication (tiny: <~1.5 MiB bf16 at R=16).
    # TODO(synk): in a training loop, hoist these constants out of the step fn.
    eye_r = jnp.eye(R, dtype=jnp.float32)
    w1a_bd = jnp.kron(eye_r, w1_t[:d1].astype(jnp.float32)).astype(jnp.bfloat16)
    w1b_bd = jnp.kron(eye_r, w1_t[d1:].astype(jnp.float32)).astype(jnp.bfloat16)
    w3_bd = jnp.kron(eye_r, w3_t.astype(jnp.float32)).astype(jnp.bfloat16)
    b1_t = jnp.tile(b1.reshape(1, H).astype(jnp.float32), (1, R))   # [1, H*R]
    b3_t = jnp.tile(b3.reshape(1, O).astype(jnp.float32), (1, R))   # [1, O*R]

    # ---- tile selection over row-groups --------------------------------------
    # Big tiles amortize the ~0.35us per-grid-step overhead; for large batches
    # cap at ~half the batch so the "parallel" grid keeps >=2 balanced steps
    # (megacore sharding on v7x).  All sizes fit well under the 48 MiB limit.
    want = max(8, (max(tile_b, R) // R) // 8 * 8)
    if Rg >= 1024:
        balanced = ((-(-Rg // 2)) + 7) // 8 * 8   # ceil(Rg/2), rounded up to 8
        want = min(want, balanced)
    tile_rows = Rg if want >= Rg else want
    grid = (pl.cdiv(Rg, tile_rows),)

    def row_spec(cols):
        return pl.BlockSpec((tile_rows, cols), lambda i: (i, 0))

    def const_spec(shape):
        return pl.BlockSpec(shape, lambda i: (0, 0))

    cost = pl.CostEstimate(
        flops=2 * Bpad * R * ((d1 + d2) * H + H * O),
        transcendentals=Bpad * (H + O),
        bytes_accessed=4 * Bpad * (d1 + d2 + 2 * O)
        + 2 * R * R * ((d1 + d2) * H + H * O) + 4 * R * (H + O),
    )

    packed = pl.pallas_call(
        _mlp_kernel,
        out_shape=jax.ShapeDtypeStruct((Rg, 2 * O * R), jnp.float32),
        grid=grid,
        in_specs=[
            row_spec(d1 * R),              # lane-packed inputs tile (streamed)
            row_spec(d2 * R),              # lane-packed demoips tile
            const_spec((d1 * R, H * R)),   # block-diag W1 rows for inputs
            const_spec((d2 * R, H * R)),   # block-diag W1 rows for demoips
            const_spec((1, H * R)),        # tiled b1
            const_spec((H * R, O * R)),    # block-diag W3
            const_spec((1, O * R)),        # tiled b3
        ],
        out_specs=row_spec(2 * O * R),     # packed [output | linear3], lane-dense
        compiler_params=pltpu.CompilerParams(
            dimension_semantics=("parallel",),
            vmem_limit_bytes=48 * 1024 * 1024),
        cost_estimate=cost,
    )(x1p, x2p, w1a_bd, w1b_bd, b1_t, w3_bd, b3_t)

    # Unpack: [Rg, O*R] -> [Bpad, O] are free row-major reshapes.
    output = packed[:, :O * R].reshape(Bpad, O)[:B]
    linear3 = packed[:, O * R:].reshape(Bpad, O)[:B]
    return output, linear3


def init_params(key, input_dim, hidden_dim1, output_dim, initrange):
    """Mimics: for param in self.parameters(): param.data.uniform_(-r, r)"""
    k1, k2, k3, k4 = jax.random.split(key, 4)
    # Stored transposed relative to torch ([out,in]) -> [in,out] for x @ W.
    w1_t = jax.random.uniform(k1, (input_dim, hidden_dim1),
                              minval=-initrange, maxval=initrange,
                              dtype=jnp.float32)
    b1 = jax.random.uniform(k2, (1, hidden_dim1),
                            minval=-initrange, maxval=initrange,
                            dtype=jnp.float32)
    w3_t = jax.random.uniform(k3, (hidden_dim1, output_dim),
                              minval=-initrange, maxval=initrange,
                              dtype=jnp.float32)
    b3 = jax.random.uniform(k4, (1, output_dim),
                            minval=-initrange, maxval=initrange,
                            dtype=jnp.float32)
    return w1_t, b1, w3_t, b3


if __name__ == "__main__":
    # Small deterministic shapes consistent with the module's forward:
    batch = 8
    d_inputs = 24          # main feature dim
    d_demoips = 8          # demographic/IP feature dim
    input_dim = d_inputs + d_demoips   # after torch.cat(..., dim=1)
    hidden_dim1 = 32
    output_dim = 4
    initrange = 0.1

    key = jax.random.PRNGKey(0)
    kx, kd, kp = jax.random.split(key, 3)
    inputs = jax.random.normal(kx, (batch, d_inputs), dtype=jnp.float32)
    inputs_demoips = jax.random.normal(kd, (batch, d_demoips), dtype=jnp.float32)
    w1_t, b1, w3_t, b3 = init_params(kp, input_dim, hidden_dim1,
                                     output_dim, initrange)

    output, linear3 = mlp_forward(inputs, inputs_demoips, w1_t, b1, w3_t, b3)
    jax.block_until_ready((output, linear3))

    # Correctness check against a pure-JAX f32 reference (bf16 MXU inputs with
    # f32 accumulation -> slightly relaxed tolerance).
    x = jnp.concatenate([inputs, inputs_demoips], axis=1)
    ref_lin3 = jax.nn.sigmoid(x @ w1_t + b1) @ w3_t + b3
    ref_out = jax.nn.sigmoid(ref_lin3)
    assert output.shape == (batch, output_dim)
    assert linear3.shape == (batch, output_dim)
    assert jnp.allclose(linear3, ref_lin3, atol=5e-2, rtol=5e-2), "linear3 mismatch"
    assert jnp.allclose(output, ref_out, atol=5e-2, rtol=5e-2), "output mismatch"

    print("KERNEL_OK")
</pallas_src>

<mosaic_0001>
module attributes {stable_mosaic.version = 11 : i64} {
  func.func @_mlp_kernel(%arg0: i32, %arg1: memref<1x384xf32, #tpu.memory_space<vmem>>, %arg2: memref<1x128xf32, #tpu.memory_space<vmem>>, %arg3: memref<384x512xbf16, #tpu.memory_space<vmem>>, %arg4: memref<128x512xbf16, #tpu.memory_space<vmem>>, %arg5: memref<1x512xf32, #tpu.memory_space<vmem>>, %arg6: memref<512x64xbf16, #tpu.memory_space<vmem>>, %arg7: memref<1x64xf32, #tpu.memory_space<vmem>>, %arg8: memref<1x128xf32, #tpu.memory_space<vmem>>) attributes {dimension_semantics = [#tpu.dimension_semantics<parallel>], iteration_bounds = array<i64: 1>, scalar_prefetch = 0 : i64, scratch_operands = 0 : i64, tpu.core_type = #tpu.core_type<tc>, window_params = [{transform_indices = @transform_0, window_bounds = array<i64: 1, 384>}, {transform_indices = @transform_1, window_bounds = array<i64: 1, 128>}, {pipeline_mode = #tpu.pipeline_mode<synchronous>, transform_indices = @transform_2, window_bounds = array<i64: 384, 512>}, {pipeline_mode = #tpu.pipeline_mode<synchronous>, transform_indices = @transform_3, window_bounds = array<i64: 128, 512>}, {pipeline_mode = #tpu.pipeline_mode<synchronous>, transform_indices = @transform_4, window_bounds = array<i64: 1, 512>}, {pipeline_mode = #tpu.pipeline_mode<synchronous>, transform_indices = @transform_5, window_bounds = array<i64: 512, 64>}, {pipeline_mode = #tpu.pipeline_mode<synchronous>, transform_indices = @transform_6, window_bounds = array<i64: 1, 64>}, {transform_indices = @transform_7, window_bounds = array<i64: 1, 128>}]} {
    %c0 = arith.constant 0 : index
    %c0_0 = arith.constant 0 : index
    %0 = vector.load %arg1[%c0, %c0_0] : memref<1x384xf32, #tpu.memory_space<vmem>>, vector<1x384xf32>
    %1 = arith.truncf %0 : vector<1x384xf32> to vector<1x384xbf16>
    %c0_1 = arith.constant 0 : index
    %c0_2 = arith.constant 0 : index
    %2 = vector.load %arg2[%c0_1, %c0_2] : memref<1x128xf32, #tpu.memory_space<vmem>>, vector<1x128xf32>
    %3 = arith.truncf %2 : vector<1x128xf32> to vector<1x128xbf16>
    %c0_3 = arith.constant 0 : index
    %c0_4 = arith.constant 0 : index
    %4 = vector.load %arg3[%c0_3, %c0_4] : memref<384x512xbf16, #tpu.memory_space<vmem>>, vector<384x512xbf16>
    %cst = arith.constant dense<0.000000e+00> : vector<1x512xf32>
    %5 = tpu.matmul %1, %4, %cst {dimension_numbers = #tpu.dot_dimension_numbers<[1], [0], [0], [1], [0, 0, 1, 1], [], []>} : vector<1x384xbf16>, vector<384x512xbf16>, vector<1x512xf32> -> vector<1x512xf32>
    %c0_5 = arith.constant 0 : index
    %c0_6 = arith.constant 0 : index
    %6 = vector.load %arg4[%c0_5, %c0_6] : memref<128x512xbf16, #tpu.memory_space<vmem>>, vector<128x512xbf16>
    %cst_7 = arith.constant dense<0.000000e+00> : vector<1x512xf32>
    %7 = tpu.matmul %3, %6, %cst_7 {dimension_numbers = #tpu.dot_dimension_numbers<[1], [0], [0], [1], [0, 0, 1, 1], [], []>} : vector<1x128xbf16>, vector<128x512xbf16>, vector<1x512xf32> -> vector<1x512xf32>
    %8 = arith.addf %5, %7 : vector<1x512xf32>
    %c0_8 = arith.constant 0 : index
    %c0_9 = arith.constant 0 : index
    %9 = vector.load %arg5[%c0_8, %c0_9] : memref<1x512xf32, #tpu.memory_space<vmem>>, vector<1x512xf32>
    %10 = arith.addf %8, %9 : vector<1x512xf32>
    %cst_10 = arith.constant 5.000000e-01 : f32
    %11 = vector.broadcast %cst_10 : f32 to vector<1x512xf32>
    %12 = arith.mulf %11, %10 : vector<1x512xf32>
    %13 = math.tanh %12 : vector<1x512xf32>
    %cst_11 = arith.constant 5.000000e-01 : f32
    %14 = vector.broadcast %cst_11 : f32 to vector<1x512xf32>
    %15 = arith.mulf %14, %13 : vector<1x512xf32>
    %cst_12 = arith.constant 5.000000e-01 : f32
    %16 = vector.broadcast %cst_12 : f32 to vector<1x512xf32>
    %17 = arith.addf %15, %16 : vector<1x512xf32>
    %18 = arith.truncf %17 : vector<1x512xf32> to vector<1x512xbf16>
    %c0_13 = arith.constant 0 : index
    %c0_14 = arith.constant 0 : index
    %19 = vector.load %arg6[%c0_13, %c0_14] : memref<512x64xbf16, #tpu.memory_space<vmem>>, vector<512x64xbf16>
    %cst_15 = arith.constant dense<0.000000e+00> : vector<1x64xf32>
    %20 = tpu.matmul %18, %19, %cst_15 {dimension_numbers = #tpu.dot_dimension_numbers<[1], [0], [0], [1], [0, 0, 1, 1], [], []>} : vector<1x512xbf16>, vector<512x64xbf16>, vector<1x64xf32> -> vector<1x64xf32>
    %c0_16 = arith.constant 0 : index
    %c0_17 = arith.constant 0 : index
    %21 = vector.load %arg7[%c0_16, %c0_17] : memref<1x64xf32, #tpu.memory_space<vmem>>, vector<1x64xf32>
    %22 = arith.addf %20, %21 : vector<1x64xf32>
    %cst_18 = arith.constant 5.000000e-01 : f32
    %23 = vector.broadcast %cst_18 : f32 to vector<1x64xf32>
    %24 = arith.mulf %23, %22 : vector<1x64xf32>
    %25 = math.tanh %24 : vector<1x64xf32>
    %cst_19 = arith.constant 5.000000e-01 : f32
    %26 = vector.broadcast %cst_19 : f32 to vector<1x64xf32>
    %27 = arith.mulf %26, %25 : vector<1x64xf32>
    %cst_20 = arith.constant 5.000000e-01 : f32
    %28 = vector.broadcast %cst_20 : f32 to vector<1x64xf32>
    %29 = arith.addf %27, %28 : vector<1x64xf32>
    %30 = tpu.concatenate %29, %22 in 1 : vector<1x64xf32>, vector<1x64xf32> -> vector<1x128xf32>
    %c0_21 = arith.constant 0 : index
    %c0_22 = arith.constant 0 : index
    %31 = vector.load %arg8[%c0_21, %c0_22] : memref<1x128xf32, #tpu.memory_space<vmem>>, vector<1x128xf32>
    tpu.vector_store %arg8[%c0_21, %c0_22], %30 {strides = array<i32>} : memref<1x128xf32, #tpu.memory_space<vmem>>, vector<1x128xf32>,
    return
  }
  func.func @transform_0(%arg0: i32) -> (i32, i32) {
    %c0_i32 = arith.constant 0 : i32
    %c0_i32_0 = arith.constant 0 : i32
    return %arg0, %c0_i32 : i32, i32
  }
  func.func @transform_1(%arg0: i32) -> (i32, i32) {
    %c0_i32 = arith.constant 0 : i32
    %c0_i32_0 = arith.constant 0 : i32
    return %arg0, %c0_i32 : i32, i32
  }
  func.func @transform_2(%arg0: i32) -> (i32, i32) {
    %c0_i32 = arith.constant 0 : i32
    %c0_i32_0 = arith.constant 0 : i32
    %c0_i32_1 = arith.constant 0 : i32
    return %c0_i32, %c0_i32_0 : i32, i32
  }
  func.func @transform_3(%arg0: i32) -> (i32, i32) {
    %c0_i32 = arith.constant 0 : i32
    %c0_i32_0 = arith.constant 0 : i32
    %c0_i32_1 = arith.constant 0 : i32
    return %c0_i32, %c0_i32_0 : i32, i32
  }
  func.func @transform_4(%arg0: i32) -> (i32, i32) {
    %c0_i32 = arith.constant 0 : i32
    %c0_i32_0 = arith.constant 0 : i32
    %c0_i32_1 = arith.constant 0 : i32
    return %c0_i32, %c0_i32_0 : i32, i32
  }
  func.func @transform_5(%arg0: i32) -> (i32, i32) {
    %c0_i32 = arith.constant 0 : i32
    %c0_i32_0 = arith.constant 0 : i32
    %c0_i32_1 = arith.constant 0 : i32
    return %c0_i32, %c0_i32_0 : i32, i32
  }
  func.func @transform_6(%arg0: i32) -> (i32, i32) {
    %c0_i32 = arith.constant 0 : i32
    %c0_i32_0 = arith.constant 0 : i32
    %c0_i32_1 = arith.constant 0 : i32
    return %c0_i32, %c0_i32_0 : i32, i32
  }
  func.func @transform_7(%arg0: i32) -> (i32, i32) {
    %c0_i32 = arith.constant 0 : i32
    %c0_i32_0 = arith.constant 0 : i32
    return %arg0, %c0_i32 : i32, i32
  }
}

</mosaic_0001>

<llo_original>
// kernel: tpu_custom_call.1
$region0: #{tpu_custom_call.1}
  #allocation0 [shape = 'u32[]', space=smem, size = 0x4, offset = 0x4, fixed_abs, tag = 'smem constant byte address 0x4 - core index']
  #allocation1 [shape = 'u32[144,128]{1,0:T(1,128)}', space=vmem, size = 0x12000, scoped, tag = 'internal scratch']
  %s0 = inlined_call_operand.vmem [shape: f32[1,384], index: 0, kind: input, shape index: {}]
  %s1 = inlined_call_operand.vmem [shape: f32[1,128], index: 1, kind: input, shape index: {}]
  %s2 = inlined_call_operand.hbm [shape: bf16[384,512], index: 2, kind: input, shape index: {}]
  %s3 = inlined_call_operand.vmem [shape: bf16[128,512], index: 3, kind: input, shape index: {}]
  %s4 = inlined_call_operand.vmem [shape: f32[1,512], index: 4, kind: input, shape index: {}]
  %s5 = inlined_call_operand.vmem [shape: bf16[512,64], index: 5, kind: input, shape index: {}]
  %s6 = inlined_call_operand.vmem [shape: f32[1,64], index: 6, kind: input, shape index: {}]
  %s7 = inlined_call_operand.hbm [shape: f32[1,128], index: 7, kind: output, shape index: {}]
  %s8 = sld [smem:[#allocation0]]
  $region42: #{tpu_custom_call.1} parent=0
    _
  %s10 = ssub.s32 1, %s8
  %s11 = scalar_select 0, %s10, %s8
  $region1: #{tpu_custom_call.1} parent=0
    #allocation2 [shape = 'u8[393216]{0}', space=vmem, size = 0x60000, scoped, tag = 'input window, operand 2, single buffered']
    #allocation3 [shape = 's32[1]{0}', space=sflag, size = 0x4, scoped, tag = 'scoped memory for tpu_custom_call.1']
    #allocation4 [shape = 's32[1]{0}', space=sflag, size = 0x4, scoped, tag = 'scoped memory for tpu_custom_call.1']
    #allocation5 [shape = 'u8[512]{0}', space=vmem, size = 0x400, scoped, tag = 'output window, operand 0, single buffered']
    %12 = vsyncpa [#allocation3], 0
    %13 = vsyncpa [#allocation4], 0
    // Predicated region
    $region2: #{tpu_custom_call.1} parent=1 // pred_check
      _
    $region3: #{tpu_custom_call.1} parent=1 // pred_check_branch
      %15 = sbr.rel (0) target = $region5
    $region4: #{tpu_custom_call.1} parent=1 // pred_region
      _
    $region5: #{tpu_custom_call.1} parent=1 // pred_fallthru
      _
    // Predicated region
    $region6: #{tpu_custom_call.1} parent=1 // pred_check
      _
    $region7: #{tpu_custom_call.1} parent=1 // pred_check_branch
      %17 = sbr.rel (0) target = $region9
    $region8: #{tpu_custom_call.1} parent=1 // pred_region
      _
    $region9: #{tpu_custom_call.1} parent=1 // pred_fallthru
      _
    // Predicated region
    $region10: #{tpu_custom_call.1} parent=1 // pred_check
      _
    $region11: #{tpu_custom_call.1} parent=1 // pred_check_branch
      %19 = sbr.rel (0) target = $region13
    $region12: #{tpu_custom_call.1} parent=1 // pred_region
      %s21 = ssub.s32 12288, 12288
      %22 = vsyncadd [#allocation3], %s21
      %s23 = sshll.u32 [#allocation2], 4
      %s24 = int_to_ptr.vmem [resolvable:$true] %s23
      %29 = dma.hbm_to_vmem [thread:$0]  %s2, 12288, %s24, [#allocation3], 256, 256, 16
    $region13: #{tpu_custom_call.1} parent=1 // pred_fallthru
      _
    // Predicated region
    $region14: #{tpu_custom_call.1} parent=1 // pred_check
      _
    $region15: #{tpu_custom_call.1} parent=1 // pred_check_branch
      %31 = sbr.rel (0) target = $region17
    $region16: #{tpu_custom_call.1} parent=1 // pred_region
      _
    $region17: #{tpu_custom_call.1} parent=1 // pred_fallthru
      _
    // Predicated region
    $region18: #{tpu_custom_call.1} parent=1 // pred_check
      _
    $region19: #{tpu_custom_call.1} parent=1 // pred_check_branch
      %33 = sbr.rel (0) target = $region21
    $region20: #{tpu_custom_call.1} parent=1 // pred_region
      _
    $region21: #{tpu_custom_call.1} parent=1 // pred_fallthru
      _
    // Predicated region
    $region22: #{tpu_custom_call.1} parent=1 // pred_check
      _
    $region23: #{tpu_custom_call.1} parent=1 // pred_check_branch
      %35 = sbr.rel (0) target = $region25
    $region24: #{tpu_custom_call.1} parent=1 // pred_region
      _
    $region25: #{tpu_custom_call.1} parent=1 // pred_fallthru
      _
    // Predicated region
    $region26: #{tpu_custom_call.1} parent=1 // pred_check
      _
    $region27: #{tpu_custom_call.1} parent=1 // pred_check_branch
      %37 = sbr.rel (0) target = $region29
    $region28: #{tpu_custom_call.1} parent=1 // pred_region
      _
    $region29: #{tpu_custom_call.1} parent=1 // pred_fallthru
      _
    // Predicated region
    $region30: #{tpu_custom_call.1} parent=1 // pred_check
      _
    $region31: #{tpu_custom_call.1} parent=1 // pred_check_branch
      %39 = sbr.rel (0) target = $region33
    $region32: #{tpu_custom_call.1} parent=1 // pred_region
      %40 = dma.done [#allocation3], 12288
    $region33: #{tpu_custom_call.1} parent=1 // pred_fallthru
      _
    %v42 = vld [vmem:[%s0] sm:$0x7]
    %v44 = vlaneseq
    %v45 = vshrl.u32 %v44, 7
    %v46 = vsub.s32 0, %v45
    %v47 = vrot.slane %v42, %v46
    %v48 = vlaneseq
    %v49 = vshrl.u32 %v48, 7
    %v50 = vsub.s32 1, %v49
    %v51 = vrot.slane %v42, %v50
    %v52 = vlaneseq
    %v53 = vshrl.u32 %v52, 7
    %v54 = vsub.s32 2, %v53
    %v55 = vrot.slane %v42, %v54
    %v59 = vpack.c.bf16 %v47, %v47
    %v60 = vpack.c.bf16 %v51, %v51
    %v61 = vpack.c.bf16 %v55, %v55
    %v62 = vld [vmem:[%s1] sm:$0x1]
    %v63 = vpack.c.bf16 %v62, %v62
    %v64 = vld [vmem:[#allocation2] sm:$0xff]
    %v65 = vld [vmem:[#allocation2 + $0x8] sm:$0xff]
    %v66 = vld [vmem:[#allocation2 + $0x10] sm:$0xff]
    %v67 = vld [vmem:[#allocation2 + $0x18] sm:$0xff]
    %v68 = vld [vmem:[#allocation2 + $0x20] sm:$0xff]
    %v69 = vld [vmem:[#allocation2 + $0x28] sm:$0xff]
    %v70 = vld [vmem:[#allocation2 + $0x30] sm:$0xff]
    %v71 = vld [vmem:[#allocation2 + $0x38] sm:$0xff]
    %v72 = vld [vmem:[#allocation2 + $0x40] sm:$0xff]
    %v73 = vld [vmem:[#allocation2 + $0x48] sm:$0xff]
    %v74 = vld [vmem:[#allocation2 + $0x50] sm:$0xff]
    %v75 = vld [vmem:[#allocation2 + $0x58] sm:$0xff]
    %v76 = vld [vmem:[#allocation2 + $0x60] sm:$0xff]
    %v77 = vld [vmem:[#allocation2 + $0x68] sm:$0xff]
    %v78 = vld [vmem:[#allocation2 + $0x70] sm:$0xff]
    %v79 = vld [vmem:[#allocation2 + $0x78] sm:$0xff]
    %v80 = vld [vmem:[#allocation2 + $0x80] sm:$0xff]
    %v81 = vld [vmem:[#allocation2 + $0x88] sm:$0xff]
    %v82 = vld [vmem:[#allocation2 + $0x90] sm:$0xff]
    %v83 = vld [vmem:[#allocation2 + $0x98] sm:$0xff]
    %v84 = vld [vmem:[#allocation2 + $0xa0] sm:$0xff]
    %v85 = vld [vmem:[#allocation2 + $0xa8] sm:$0xff]
    %v86 = vld [vmem:[#allocation2 + $0xb0] sm:$0xff]
    %v87 = vld [vmem:[#allocation2 + $0xb8] sm:$0xff]
    %v88 = vld [vmem:[#allocation2 + $0xc0] sm:$0xff]
    %v89 = vld [vmem:[#allocation2 + $0xc8] sm:$0xff]
    %v90 = vld [vmem:[#allocation2 + $0xd0] sm:$0xff]
    %v91 = vld [vmem:[#allocation2 + $0xd8] sm:$0xff]
    %v92 = vld [vmem:[#allocation2 + $0xe0] sm:$0xff]
    %v93 = vld [vmem:[#allocation2 + $0xe8] sm:$0xff]
    %v94 = vld [vmem:[#allocation2 + $0xf0] sm:$0xff]
    %v95 = vld [vmem:[#allocation2 + $0xf8] sm:$0xff]
    %v96 = vld [vmem:[#allocation2 + $0x100] sm:$0xff]
    %v97 = vld [vmem:[#allocation2 + $0x108] sm:$0xff]
    %v98 = vld [vmem:[#allocation2 + $0x110] sm:$0xff]
    %v99 = vld [vmem:[#allocation2 + $0x118] sm:$0xff]
    %v100 = vld [vmem:[#allocation2 + $0x120] sm:$0xff]
    %v101 = vld [vmem:[#allocation2 + $0x128] sm:$0xff]
    %v102 = vld [vmem:[#allocation2 + $0x130] sm:$0xff]
    %v103 = vld [vmem:[#allocation2 + $0x138] sm:$0xff]
    %v104 = vld [vmem:[#allocation2 + $0x140] sm:$0xff]
    %v105 = vld [vmem:[#allocation2 + $0x148] sm:$0xff]
    %v106 = vld [vmem:[#allocation2 + $0x150] sm:$0xff]
    %v107 = vld [vmem:[#allocation2 + $0x158] sm:$0xff]
    %v108 = vld [vmem:[#allocation2 + $0x160] sm:$0xff]
    %v109 = vld [vmem:[#allocation2 + $0x168] sm:$0xff]
    %v110 = vld [vmem:[#allocation2 + $0x170] sm:$0xff]
    %v111 = vld [vmem:[#allocation2 + $0x178] sm:$0xff]
    %v112 = vld [vmem:[#allocation2 + $0x180] sm:$0xff]
    %v113 = vld [vmem:[#allocation2 + $0x188] sm:$0xff]
    %v114 = vld [vmem:[#allocation2 + $0x190] sm:$0xff]
    %v115 = vld [vmem:[#allocation2 + $0x198] sm:$0xff]
    %v116 = vld [vmem:[#allocation2 + $0x1a0] sm:$0xff]
    %v117 = vld [vmem:[#allocation2 + $0x1a8] sm:$0xff]
    %v118 = vld [vmem:[#allocation2 + $0x1b0] sm:$0xff]
    %v119 = vld [vmem:[#allocation2 + $0x1b8] sm:$0xff]
    %v120 = vld [vmem:[#allocation2 + $0x1c0] sm:$0xff]
    %v121 = vld [vmem:[#allocation2 + $0x1c8] sm:$0xff]
    %v122 = vld [vmem:[#allocation2 + $0x1d0] sm:$0xff]
    %v123 = vld [vmem:[#allocation2 + $0x1d8] sm:$0xff]
    %v124 = vld [vmem:[#allocation2 + $0x1e0] sm:$0xff]
    %v125 = vld [vmem:[#allocation2 + $0x1e8] sm:$0xff]
    %v126 = vld [vmem:[#allocation2 + $0x1f0] sm:$0xff]
    %v127 = vld [vmem:[#allocation2 + $0x1f8] sm:$0xff]
    %v128 = vld [vmem:[#allocation2 + $0x200] sm:$0xff]
    %v129 = vld [vmem:[#allocation2 + $0x208] sm:$0xff]
    %v130 = vld [vmem:[#allocation2 + $0x210] sm:$0xff]
    %v131 = vld [vmem:[#allocation2 + $0x218] sm:$0xff]
    %v132 = vld [vmem:[#allocation2 + $0x220] sm:$0xff]
    %v133 = vld [vmem:[#allocation2 + $0x228] sm:$0xff]
    %v134 = vld [vmem:[#allocation2 + $0x230] sm:$0xff]
    %v135 = vld [vmem:[#allocation2 + $0x238] sm:$0xff]
    %v136 = vld [vmem:[#allocation2 + $0x240] sm:$0xff]
    %v137 = vld [vmem:[#allocation2 + $0x248] sm:$0xff]
    %v138 = vld [vmem:[#allocation2 + $0x250] sm:$0xff]
    %v139 = vld [vmem:[#allocation2 + $0x258] sm:$0xff]
    %v140 = vld [vmem:[#allocation2 + $0x260] sm:$0xff]
    %v141 = vld [vmem:[#allocation2 + $0x268] sm:$0xff]
    %v142 = vld [vmem:[#allocation2 + $0x270] sm:$0xff]
    %v143 = vld [vmem:[#allocation2 + $0x278] sm:$0xff]
    %v144 = vld [vmem:[#allocation2 + $0x280] sm:$0xff]
    %v145 = vld [vmem:[#allocation2 + $0x288] sm:$0xff]
    %v146 = vld [vmem:[#allocation2 + $0x290] sm:$0xff]
    %v147 = vld [vmem:[#allocation2 + $0x298] sm:$0xff]
    %v148 = vld [vmem:[#allocation2 + $0x2a0] sm:$0xff]
    %v149 = vld [vmem:[#allocation2 + $0x2a8] sm:$0xff]
    %v150 = vld [vmem:[#allocation2 + $0x2b0] sm:$0xff]
    %v151 = vld [vmem:[#allocation2 + $0x2b8] sm:$0xff]
    %v152 = vld [vmem:[#allocation2 + $0x2c0] sm:$0xff]
    %v153 = vld [vmem:[#allocation2 + $0x2c8] sm:$0xff]
    %v154 = vld [vmem:[#allocation2 + $0x2d0] sm:$0xff]
    %v155 = vld [vmem:[#allocation2 + $0x2d8] sm:$0xff]
    %v156 = vld [vmem:[#allocation2 + $0x2e0] sm:$0xff]
    %v157 = vld [vmem:[#allocation2 + $0x2e8] sm:$0xff]
    %v158 = vld [vmem:[#allocation2 + $0x2f0] sm:$0xff]
    %v159 = vld [vmem:[#allocation2 + $0x2f8] sm:$0xff]
    %v160 = vld [vmem:[%s3] sm:$0xff]
    %v161 = vld [vmem:[%s3 + $0x8] sm:$0xff]
    %v162 = vld [vmem:[%s3 + $0x10] sm:$0xff]
    %v163 = vld [vmem:[%s3 + $0x18] sm:$0xff]
    %v164 = vld [vmem:[%s3 + $0x20] sm:$0xff]
    %v165 = vld [vmem:[%s3 + $0x28] sm:$0xff]
    %v166 = vld [vmem:[%s3 + $0x30] sm:$0xff]
    %v167 = vld [vmem:[%s3 + $0x38] sm:$0xff]
    %v168 = vld [vmem:[%s3 + $0x40] sm:$0xff]
    %v169 = vld [vmem:[%s3 + $0x48] sm:$0xff]
    %v170 = vld [vmem:[%s3 + $0x50] sm:$0xff]
    %v171 = vld [vmem:[%s3 + $0x58] sm:$0xff]
    %v172 = vld [vmem:[%s3 + $0x60] sm:$0xff]
    %v173 = vld [vmem:[%s3 + $0x68] sm:$0xff]
    %v174 = vld [vmem:[%s3 + $0x70] sm:$0xff]
    %v175 = vld [vmem:[%s3 + $0x78] sm:$0xff]
    %v176 = vld [vmem:[%s3 + $0x80] sm:$0xff]
    %v177 = vld [vmem:[%s3 + $0x88] sm:$0xff]
    %v178 = vld [vmem:[%s3 + $0x90] sm:$0xff]
    %v179 = vld [vmem:[%s3 + $0x98] sm:$0xff]
    %v180 = vld [vmem:[%s3 + $0xa0] sm:$0xff]
    %v181 = vld [vmem:[%s3 + $0xa8] sm:$0xff]
    %v182 = vld [vmem:[%s3 + $0xb0] sm:$0xff]
    %v183 = vld [vmem:[%s3 + $0xb8] sm:$0xff]
    %v184 = vld [vmem:[%s3 + $0xc0] sm:$0xff]
    %v185 = vld [vmem:[%s3 + $0xc8] sm:$0xff]
    %v186 = vld [vmem:[%s3 + $0xd0] sm:$0xff]
    %v187 = vld [vmem:[%s3 + $0xd8] sm:$0xff]
    %v188 = vld [vmem:[%s3 + $0xe0] sm:$0xff]
    %v189 = vld [vmem:[%s3 + $0xe8] sm:$0xff]
    %v190 = vld [vmem:[%s3 + $0xf0] sm:$0xff]
    %v191 = vld [vmem:[%s3 + $0xf8] sm:$0xff]
    %v224 = vunpack.c.l.b16 %v160
    %v225 = vunpack.c.h.b16 %v160
    %v226 = vunpack.c.l.b16 %v161
    %v227 = vunpack.c.h.b16 %v161
    %v228 = vunpack.c.l.b16 %v162
    %v229 = vunpack.c.h.b16 %v162
    %v230 = vunpack.c.l.b16 %v163
    %v231 = vunpack.c.h.b16 %v163
    %v232 = vunpack.c.l.b16 %v164
    %v233 = vunpack.c.h.b16 %v164
    %v234 = vunpack.c.l.b16 %v165
    %v235 = vunpack.c.h.b16 %v165
    %v236 = vunpack.c.l.b16 %v166
    %v237 = vunpack.c.h.b16 %v166
    %v238 = vunpack.c.l.b16 %v167
    %v239 = vunpack.c.h.b16 %v167
    %v240 = vunpack.c.l.b16 %v168
    %v241 = vunpack.c.h.b16 %v168
    %v242 = vunpack.c.l.b16 %v169
    %v243 = vunpack.c.h.b16 %v169
    %v244 = vunpack.c.l.b16 %v170
    %v245 = vunpack.c.h.b16 %v170
    %v246 = vunpack.c.l.b16 %v171
    %v247 = vunpack.c.h.b16 %v171
    %v248 = vunpack.c.l.b16 %v172
    %v249 = vunpack.c.h.b16 %v172
    %v250 = vunpack.c.l.b16 %v173
    %v251 = vunpack.c.h.b16 %v173
    %v252 = vunpack.c.l.b16 %v174
    %v253 = vunpack.c.h.b16 %v174
    %v254 = vunpack.c.l.b16 %v175
    %v255 = vunpack.c.h.b16 %v175
    %v256 = vunpack.c.l.b16 %v176
    %v257 = vunpack.c.h.b16 %v176
    %v258 = vunpack.c.l.b16 %v177
    %v259 = vunpack.c.h.b16 %v177
    %v260 = vunpack.c.l.b16 %v178
    %v261 = vunpack.c.h.b16 %v178
    %v262 = vunpack.c.l.b16 %v179
    %v263 = vunpack.c.h.b16 %v179
    %v264 = vunpack.c.l.b16 %v180
    %v265 = vunpack.c.h.b16 %v180
    %v266 = vunpack.c.l.b16 %v181
    %v267 = vunpack.c.h.b16 %v181
    %v268 = vunpack.c.l.b16 %v182
    %v269 = vunpack.c.h.b16 %v182
    %v270 = vunpack.c.l.b16 %v183
    %v271 = vunpack.c.h.b16 %v183
    %v272 = vunpack.c.l.b16 %v184
    %v273 = vunpack.c.h.b16 %v184
    %v274 = vunpack.c.l.b16 %v185
    %v275 = vunpack.c.h.b16 %v185
    %v276 = vunpack.c.l.b16 %v186
    %v277 = vunpack.c.h.b16 %v186
    %v278 = vunpack.c.l.b16 %v187
    %v279 = vunpack.c.h.b16 %v187
    %v280 = vunpack.c.l.b16 %v188
    %v281 = vunpack.c.h.b16 %v188
    %v282 = vunpack.c.l.b16 %v189
    %v283 = vunpack.c.h.b16 %v189
    %v284 = vunpack.c.l.b16 %v190
    %v285 = vunpack.c.h.b16 %v190
    %v286 = vunpack.c.l.b16 %v191
    %v287 = vunpack.c.h.b16 %v191
    %v288 = vpack.c.b16 %v228, %v224
    %v289 = vpack.c.b16 %v229, %v225
    %v290 = vpack.c.b16 %v230, %v226
    %v291 = vpack.c.b16 %v231, %v227
    %v292 = vpack.c.b16 %v236, %v232
    %v293 = vpack.c.b16 %v237, %v233
    %v294 = vpack.c.b16 %v238, %v234
    %v295 = vpack.c.b16 %v239, %v235
    %v296 = vpack.c.b16 %v244, %v240
    %v297 = vpack.c.b16 %v245, %v241
    %v298 = vpack.c.b16 %v246, %v242
    %v299 = vpack.c.b16 %v247, %v243
    %v300 = vpack.c.b16 %v252, %v248
    %v301 = vpack.c.b16 %v253, %v249
    %v302 = vpack.c.b16 %v254, %v250
    %v303 = vpack.c.b16 %v255, %v251
    %v304 = vpack.c.b16 %v260, %v256
    %v305 = vpack.c.b16 %v261, %v257
    %v306 = vpack.c.b16 %v262, %v258
    %v307 = vpack.c.b16 %v263, %v259
    %v308 = vpack.c.b16 %v268, %v264
    %v309 = vpack.c.b16 %v269, %v265
    %v310 = vpack.c.b16 %v270, %v266
    %v311 = vpack.c.b16 %v271, %v267
    %v312 = vpack.c.b16 %v276, %v272
    %v313 = vpack.c.b16 %v277, %v273
    %v314 = vpack.c.b16 %v278, %v274
    %v315 = vpack.c.b16 %v279, %v275
    %v316 = vpack.c.b16 %v284, %v280
    %v317 = vpack.c.b16 %v285, %v281
    %v318 = vpack.c.b16 %v286, %v282
    %v319 = vpack.c.b16 %v287, %v283
    %352 = vmatprep.subr.bf16.mxu0 %v317
    %353 = vmatpush1.bf16.msra.mxu0 %v316
    %354 = vmatprep.subr.bf16.mxu0 %v313
    %355 = vmatpush1.bf16.msra.mxu0 %v312
    %356 = vmatprep.subr.bf16.mxu0 %v309
    %357 = vmatpush1.bf16.msra.mxu0 %v308
    %358 = vmatprep.subr.bf16.mxu0 %v305
    %359 = vmatpush1.bf16.msra.mxu0 %v304
    %360 = vmatprep.subr.bf16.mxu0 %v301
    %361 = vmatpush1.bf16.msra.mxu0 %v300
    %362 = vmatprep.subr.bf16.mxu0 %v297
    %363 = vmatpush1.bf16.msra.mxu0 %v296
    %364 = vmatprep.subr.bf16.mxu0 %v293
    %365 = vmatpush1.bf16.msra.mxu0 %v292
    %366 = vmatprep.subr.bf16.mxu0 %v289
    %367 = vmatpush1.bf16.msra.mxu0 %v288
    %368 = vmatprep.subr.bf16.mxu0 0
    %369 = vmatpush2.bf16.msra.mxu0 0
    %370 = vmatprep.subr.bf16.mxu0 0
    %371 = vmatpush2.bf16.msra.mxu0 0
    %372 = vmatprep.subr.bf16.mxu0 0
    %373 = vmatpush2.bf16.msra.mxu0 0
    %374 = vmatprep.subr.bf16.mxu0 0
    %375 = vmatpush2.bf16.msra.mxu0 0
    %376 = vmatprep.subr.bf16.mxu0 0
    %377 = vmatpush2.bf16.msra.mxu0 0
    %378 = vmatprep.subr.bf16.mxu0 0
    %379 = vmatpush2.bf16.msra.mxu0 0
    %380 = vmatprep.subr.bf16.mxu0 0
    %381 = vmatpush2.bf16.msra.mxu0 0
    %382 = vmatprep.subr.bf16.mxu0 0
    %383 = vmatpush2.bf16.msra.mxu0 0
    %384 = vmatprep.mubr.bf16.mxu0 0
    %385 = vmatmul.mubr.bf16.gmra.mxu0 %v63
    %v386 = vpop.f32.mrf.mxu0
    %v387 = vadd.f32 0.0, %v386
    %v388 = vpop.f32.mrf.mxu0
    %v389 = vadd.f32 0.0, %v388
    %v390 = vpop.f32.mrf.mxu0
    %v391 = vpop.f32.mrf.mxu0
    %392 = vdwg.mxu0
    %393 = vmatprep.subr.bf16.mxu0 %v319
    %394 = vmatpush1.bf16.msra.mxu0 %v318
    %395 = vmatprep.subr.bf16.mxu0 %v315
    %396 = vmatpush1.bf16.msra.mxu0 %v314
    %397 = vmatprep.subr.bf16.mxu0 %v311
    %398 = vmatpush1.bf16.msra.mxu0 %v310
    %399 = vmatprep.subr.bf16.mxu0 %v307
    %400 = vmatpush1.bf16.msra.mxu0 %v306
    %401 = vmatprep.subr.bf16.mxu0 %v303
    %402 = vmatpush1.bf16.msra.mxu0 %v302
    %403 = vmatprep.subr.bf16.mxu0 %v299
    %404 = vmatpush1.bf16.msra.mxu0 %v298
    %405 = vmatprep.subr.bf16.mxu0 %v295
    %406 = vmatpush1.bf16.msra.mxu0 %v294
    %407 = vmatprep.subr.bf16.mxu0 %v291
    %408 = vmatpush1.bf16.msra.mxu0 %v290
    %409 = vmatprep.subr.bf16.mxu0 0
    %410 = vmatpush2.bf16.msra.mxu0 0
    %411 = vmatprep.subr.bf16.mxu0 0
    %412 = vmatpush2.bf16.msra.mxu0 0
    %413 = vmatprep.subr.bf16.mxu0 0
    %414 = vmatpush2.bf16.msra.mxu0 0
    %415 = vmatprep.subr.bf16.mxu0 0
    %416 = vmatpush2.bf16.msra.mxu0 0
    %417 = vmatprep.subr.bf16.mxu0 0
    %418 = vmatpush2.bf16.msra.mxu0 0
    %419 = vmatprep.subr.bf16.mxu0 0
    %420 = vmatpush2.bf16.msra.mxu0 0
    %421 = vmatprep.subr.bf16.mxu0 0
    %422 = vmatpush2.bf16.msra.mxu0 0
    %423 = vmatprep.subr.bf16.mxu0 0
    %424 = vmatpush2.bf16.msra.mxu0 0
    %425 = vmatprep.mubr.bf16.mxu0 0
    %426 = vmatmul.mubr.bf16.gmra.mxu0 %v63
    %v427 = vpop.f32.mrf.mxu0
    %v428 = vadd.f32 0.0, %v427
    %v429 = vpop.f32.mrf.mxu0
    %v430 = vadd.f32 0.0, %v429
    %v431 = vpop.f32.mrf.mxu0
    %v432 = vpop.f32.mrf.mxu0
    %433 = vdwg.mxu0
    %v530 = vunpack.c.l.b16 %v64
    %v531 = vunpack.c.h.b16 %v64
    %v532 = vunpack.c.l.b16 %v65
    %v533 = vunpack.c.h.b16 %v65
    %v534 = vunpack.c.l.b16 %v66
    %v535 = vunpack.c.h.b16 %v66
    %v536 = vunpack.c.l.b16 %v67
    %v537 = vunpack.c.h.b16 %v67
    %v538 = vunpack.c.l.b16 %v68
    %v539 = vunpack.c.h.b16 %v68
    %v540 = vunpack.c.l.b16 %v69
    %v541 = vunpack.c.h.b16 %v69
    %v542 = vunpack.c.l.b16 %v70
    %v543 = vunpack.c.h.b16 %v70
    %v544 = vunpack.c.l.b16 %v71
    %v545 = vunpack.c.h.b16 %v71
    %v546 = vunpack.c.l.b16 %v72
    %v547 = vunpack.c.h.b16 %v72
    %v548 = vunpack.c.l.b16 %v73
    %v549 = vunpack.c.h.b16 %v73
    %v550 = vunpack.c.l.b16 %v74
    %v551 = vunpack.c.h.b16 %v74
    %v552 = vunpack.c.l.b16 %v75
    %v553 = vunpack.c.h.b16 %v75
    %v554 = vunpack.c.l.b16 %v76
    %v555 = vunpack.c.h.b16 %v76
    %v556 = vunpack.c.l.b16 %v77
    %v557 = vunpack.c.h.b16 %v77
    %v558 = vunpack.c.l.b16 %v78
    %v559 = vunpack.c.h.b16 %v78
    %v560 = vunpack.c.l.b16 %v79
    %v561 = vunpack.c.h.b16 %v79
    %v562 = vunpack.c.l.b16 %v80
    %v563 = vunpack.c.h.b16 %v80
    %v564 = vunpack.c.l.b16 %v81
    %v565 = vunpack.c.h.b16 %v81
    %v566 = vunpack.c.l.b16 %v82
    %v567 = vunpack.c.h.b16 %v82
    %v568 = vunpack.c.l.b16 %v83
    %v569 = vunpack.c.h.b16 %v83
    %v570 = vunpack.c.l.b16 %v84
    %v571 = vunpack.c.h.b16 %v84
    %v572 = vunpack.c.l.b16 %v85
    %v573 = vunpack.c.h.b16 %v85
    %v574 = vunpack.c.l.b16 %v86
    %v575 = vunpack.c.h.b16 %v86
    %v576 = vunpack.c.l.b16 %v87
    %v577 = vunpack.c.h.b16 %v87
    %v578 = vunpack.c.l.b16 %v88
    %v579 = vunpack.c.h.b16 %v88
    %v580 = vunpack.c.l.b16 %v89
    %v581 = vunpack.c.h.b16 %v89
    %v582 = vunpack.c.l.b16 %v90
    %v583 = vunpack.c.h.b16 %v90
    %v584 = vunpack.c.l.b16 %v91
    %v585 = vunpack.c.h.b16 %v91
    %v586 = vunpack.c.l.b16 %v92
    %v587 = vunpack.c.h.b16 %v92
    %v588 = vunpack.c.l.b16 %v93
    %v589 = vunpack.c.h.b16 %v93
    %v590 = vunpack.c.l.b16 %v94
    %v591 = vunpack.c.h.b16 %v94
    %v592 = vunpack.c.l.b16 %v95
    %v593 = vunpack.c.h.b16 %v95
    %v594 = vunpack.c.l.b16 %v96
    %v595 = vunpack.c.h.b16 %v96
    %v596 = vunpack.c.l.b16 %v97
    %v597 = vunpack.c.h.b16 %v97
    %v598 = vunpack.c.l.b16 %v98
    %v599 = vunpack.c.h.b16 %v98
    %v600 = vunpack.c.l.b16 %v99
    %v601 = vunpack.c.h.b16 %v99
    %v602 = vunpack.c.l.b16 %v100
    %v603 = vunpack.c.h.b16 %v100
    %v604 = vunpack.c.l.b16 %v101
    %v605 = vunpack.c.h.b16 %v101
    %v606 = vunpack.c.l.b16 %v102
    %v607 = vunpack.c.h.b16 %v102
    %v608 = vunpack.c.l.b16 %v103
    %v609 = vunpack.c.h.b16 %v103
    %v610 = vunpack.c.l.b16 %v104
    %v611 = vunpack.c.h.b16 %v104
    %v612 = vunpack.c.l.b16 %v105
    %v613 = vunpack.c.h.b16 %v105
    %v614 = vunpack.c.l.b16 %v106
    %v615 = vunpack.c.h.b16 %v106
    %v616 = vunpack.c.l.b16 %v107
    %v617 = vunpack.c.h.b16 %v107
    %v618 = vunpack.c.l.b16 %v108
    %v619 = vunpack.c.h.b16 %v108
    %v620 = vunpack.c.l.b16 %v109
    %v621 = vunpack.c.h.b16 %v109
    %v622 = vunpack.c.l.b16 %v110
    %v623 = vunpack.c.h.b16 %v110
    %v624 = vunpack.c.l.b16 %v111
    %v625 = vunpack.c.h.b16 %v111
    %v626 = vunpack.c.l.b16 %v112
    %v627 = vunpack.c.h.b16 %v112
    %v628 = vunpack.c.l.b16 %v113
    %v629 = vunpack.c.h.b16 %v113
    %v630 = vunpack.c.l.b16 %v114
    %v631 = vunpack.c.h.b16 %v114
    %v632 = vunpack.c.l.b16 %v115
    %v633 = vunpack.c.h.b16 %v115
    %v634 = vunpack.c.l.b16 %v116
    %v635 = vunpack.c.h.b16 %v116
    %v636 = vunpack.c.l.b16 %v117
    %v637 = vunpack.c.h.b16 %v117
    %v638 = vunpack.c.l.b16 %v118
    %v639 = vunpack.c.h.b16 %v118
    %v640 = vunpack.c.l.b16 %v119
    %v641 = vunpack.c.h.b16 %v119
    %v642 = vunpack.c.l.b16 %v120
    %v643 = vunpack.c.h.b16 %v120
    %v644 = vunpack.c.l.b16 %v121
    %v645 = vunpack.c.h.b16 %v121
    %v646 = vunpack.c.l.b16 %v122
    %v647 = vunpack.c.h.b16 %v122
    %v648 = vunpack.c.l.b16 %v123
    %v649 = vunpack.c.h.b16 %v123
    %v650 = vunpack.c.l.b16 %v124
    %v651 = vunpack.c.h.b16 %v124
    %v652 = vunpack.c.l.b16 %v125
    %v653 = vunpack.c.h.b16 %v125
    %v654 = vunpack.c.l.b16 %v126
    %v655 = vunpack.c.h.b16 %v126
    %v656 = vunpack.c.l.b16 %v127
    %v657 = vunpack.c.h.b16 %v127
    %v658 = vunpack.c.l.b16 %v128
    %v659 = vunpack.c.h.b16 %v128
    %v660 = vunpack.c.l.b16 %v129
    %v661 = vunpack.c.h.b16 %v129
    %v662 = vunpack.c.l.b16 %v130
    %v663 = vunpack.c.h.b16 %v130
    %v664 = vunpack.c.l.b16 %v131
    %v665 = vunpack.c.h.b16 %v131
    %v666 = vunpack.c.l.b16 %v132
    %v667 = vunpack.c.h.b16 %v132
    %v668 = vunpack.c.l.b16 %v133
    %v669 = vunpack.c.h.b16 %v133
    %v670 = vunpack.c.l.b16 %v134
    %v671 = vunpack.c.h.b16 %v134
    %v672 = vunpack.c.l.b16 %v135
    %v673 = vunpack.c.h.b16 %v135
    %v674 = vunpack.c.l.b16 %v136
    %v675 = vunpack.c.h.b16 %v136
    %v676 = vunpack.c.l.b16 %v137
    %v677 = vunpack.c.h.b16 %v137
    %v678 = vunpack.c.l.b16 %v138
    %v679 = vunpack.c.h.b16 %v138
    %v680 = vunpack.c.l.b16 %v139
    %v681 = vunpack.c.h.b16 %v139
    %v682 = vunpack.c.l.b16 %v140
    %v683 = vunpack.c.h.b16 %v140
    %v684 = vunpack.c.l.b16 %v141
    %v685 = vunpack.c.h.b16 %v141
    %v686 = vunpack.c.l.b16 %v142
    %v687 = vunpack.c.h.b16 %v142
    %v688 = vunpack.c.l.b16 %v143
    %v689 = vunpack.c.h.b16 %v143
    %v690 = vunpack.c.l.b16 %v144
    %v691 = vunpack.c.h.b16 %v144
    %v692 = vunpack.c.l.b16 %v145
    %v693 = vunpack.c.h.b16 %v145
    %v694 = vunpack.c.l.b16 %v146
    %v695 = vunpack.c.h.b16 %v146
    %v696 = vunpack.c.l.b16 %v147
    %v697 = vunpack.c.h.b16 %v147
    %v698 = vunpack.c.l.b16 %v148
    %v699 = vunpack.c.h.b16 %v148
    %v700 = vunpack.c.l.b16 %v149
    %v701 = vunpack.c.h.b16 %v149
    %v702 = vunpack.c.l.b16 %v150
    %v703 = vunpack.c.h.b16 %v150
    %v704 = vunpack.c.l.b16 %v151
    %v705 = vunpack.c.h.b16 %v151
    %v706 = vunpack.c.l.b16 %v152
    %v707 = vunpack.c.h.b16 %v152
    %v708 = vunpack.c.l.b16 %v153
    %v709 = vunpack.c.h.b16 %v153
    %v710 = vunpack.c.l.b16 %v154
    %v711 = vunpack.c.h.b16 %v154
    %v712 = vunpack.c.l.b16 %v155
    %v713 = vunpack.c.h.b16 %v155
    %v714 = vunpack.c.l.b16 %v156
    %v715 = vunpack.c.h.b16 %v156
    %v716 = vunpack.c.l.b16 %v157
    %v717 = vunpack.c.h.b16 %v157
    %v718 = vunpack.c.l.b16 %v158
    %v719 = vunpack.c.h.b16 %v158
    %v720 = vunpack.c.l.b16 %v159
    %v721 = vunpack.c.h.b16 %v159
    %v722 = vpack.c.b16 %v534, %v530
    %v723 = vpack.c.b16 %v535, %v531
    %v724 = vpack.c.b16 %v536, %v532
    %v725 = vpack.c.b16 %v537, %v533
    %v726 = vpack.c.b16 %v542, %v538
    %v727 = vpack.c.b16 %v543, %v539
    %v728 = vpack.c.b16 %v544, %v540
    %v729 = vpack.c.b16 %v545, %v541
    %v730 = vpack.c.b16 %v550, %v546
    %v731 = vpack.c.b16 %v551, %v547
    %v732 = vpack.c.b16 %v552, %v548
    %v733 = vpack.c.b16 %v553, %v549
    %v734 = vpack.c.b16 %v558, %v554
    %v735 = vpack.c.b16 %v559, %v555
    %v736 = vpack.c.b16 %v560, %v556
    %v737 = vpack.c.b16 %v561, %v557
    %v738 = vpack.c.b16 %v566, %v562
    %v739 = vpack.c.b16 %v567, %v563
    %v740 = vpack.c.b16 %v568, %v564
    %v741 = vpack.c.b16 %v569, %v565
    %v742 = vpack.c.b16 %v574, %v570
    %v743 = vpack.c.b16 %v575, %v571
    %v744 = vpack.c.b16 %v576, %v572
    %v745 = vpack.c.b16 %v577, %v573
    %v746 = vpack.c.b16 %v582, %v578
    %v747 = vpack.c.b16 %v583, %v579
    %v748 = vpack.c.b16 %v584, %v580
    %v749 = vpack.c.b16 %v585, %v581
    %v750 = vpack.c.b16 %v590, %v586
    %v751 = vpack.c.b16 %v591, %v587
    %v752 = vpack.c.b16 %v592, %v588
    %v753 = vpack.c.b16 %v593, %v589
    %v754 = vpack.c.b16 %v598, %v594
    %v755 = vpack.c.b16 %v599, %v595
    %v756 = vpack.c.b16 %v600, %v596
    %v757 = vpack.c.b16 %v601, %v597
    %v758 = vpack.c.b16 %v606, %v602
    %v759 = vpack.c.b16 %v607, %v603
    %v760 = vpack.c.b16 %v608, %v604
    %v761 = vpack.c.b16 %v609, %v605
    %v762 = vpack.c.b16 %v614, %v610
    %v763 = vpack.c.b16 %v615, %v611
    %v764 = vpack.c.b16 %v616, %v612
    %v765 = vpack.c.b16 %v617, %v613
    %v766 = vpack.c.b16 %v622, %v618
    %v767 = vpack.c.b16 %v623, %v619
    %v768 = vpack.c.b16 %v624, %v620
    %v769 = vpack.c.b16 %v625, %v621
    %v770 = vpack.c.b16 %v630, %v626
    %v771 = vpack.c.b16 %v631, %v627
    %v772 = vpack.c.b16 %v632, %v628
    %v773 = vpack.c.b16 %v633, %v629
    %v774 = vpack.c.b16 %v638, %v634
    %v775 = vpack.c.b16 %v639, %v635
    %v776 = vpack.c.b16 %v640, %v636
    %v777 = vpack.c.b16 %v641, %v637
    %v778 = vpack.c.b16 %v646, %v642
    %v779 = vpack.c.b16 %v647, %v643
    %v780 = vpack.c.b16 %v648, %v644
    %v781 = vpack.c.b16 %v649, %v645
    %v782 = vpack.c.b16 %v654, %v650
    %v783 = vpack.c.b16 %v655, %v651
    %v784 = vpack.c.b16 %v656, %v652
    %v785 = vpack.c.b16 %v657, %v653
    %v786 = vpack.c.b16 %v662, %v658
    %v787 = vpack.c.b16 %v663, %v659
    %v788 = vpack.c.b16 %v664, %v660
    %v789 = vpack.c.b16 %v665, %v661
    %v790 = vpack.c.b16 %v670, %v666
    %v791 = vpack.c.b16 %v671, %v667
    %v792 = vpack.c.b16 %v672, %v668
    %v793 = vpack.c.b16 %v673, %v669
    %v794 = vpack.c.b16 %v678, %v674
    %v795 = vpack.c.b16 %v679, %v675
    %v796 = vpack.c.b16 %v680, %v676
    %v797 = vpack.c.b16 %v681, %v677
    %v798 = vpack.c.b16 %v686, %v682
    %v799 = vpack.c.b16 %v687, %v683
    %v800 = vpack.c.b16 %v688, %v684
    %v801 = vpack.c.b16 %v689, %v685
    %v802 = vpack.c.b16 %v694, %v690
    %v803 = vpack.c.b16 %v695, %v691
    %v804 = vpack.c.b16 %v696, %v692
    %v805 = vpack.c.b16 %v697, %v693
    %v806 = vpack.c.b16 %v702, %v698
    %v807 = vpack.c.b16 %v703, %v699
    %v808 = vpack.c.b16 %v704, %v700
    %v809 = vpack.c.b16 %v705, %v701
    %v810 = vpack.c.b16 %v710, %v706
    %v811 = vpack.c.b16 %v711, %v707
    %v812 = vpack.c.b16 %v712, %v708
    %v813 = vpack.c.b16 %v713, %v709
    %v814 = vpack.c.b16 %v718, %v714
    %v815 = vpack.c.b16 %v719, %v715
    %v816 = vpack.c.b16 %v720, %v716
    %v817 = vpack.c.b16 %v721, %v717
    %914 = vmatprep.subr.bf16.mxu0 %v751
    %915 = vmatpush1.bf16.msra.mxu0 %v750
    %916 = vmatprep.subr.bf16.mxu0 %v747
    %917 = vmatpush1.bf16.msra.mxu0 %v746
    %918 = vmatprep.subr.bf16.mxu0 %v743
    %919 = vmatpush1.bf16.msra.mxu0 %v742
    %920 = vmatprep.subr.bf16.mxu0 %v739
    %921 = vmatpush1.bf16.msra.mxu0 %v738
    %922 = vmatprep.subr.bf16.mxu0 %v735
    %923 = vmatpush1.bf16.msra.mxu0 %v734
    %924 = vmatprep.subr.bf16.mxu0 %v731
    %925 = vmatpush1.bf16.msra.mxu0 %v730
    %926 = vmatprep.subr.bf16.mxu0 %v727
    %927 = vmatpush1.bf16.msra.mxu0 %v726
    %928 = vmatprep.subr.bf16.mxu0 %v723
    %929 = vmatpush1.bf16.msra.mxu0 %v722
    %930 = vmatprep.subr.bf16.mxu0 %v783
    %931 = vmatpush2.bf16.msra.mxu0 %v782
    %932 = vmatprep.subr.bf16.mxu0 %v779
    %933 = vmatpush2.bf16.msra.mxu0 %v778
    %934 = vmatprep.subr.bf16.mxu0 %v775
    %935 = vmatpush2.bf16.msra.mxu0 %v774
    %936 = vmatprep.subr.bf16.mxu0 %v771
    %937 = vmatpush2.bf16.msra.mxu0 %v770
    %938 = vmatprep.subr.bf16.mxu0 %v767
    %939 = vmatpush2.bf16.msra.mxu0 %v766
    %940 = vmatprep.subr.bf16.mxu0 %v763
    %941 = vmatpush2.bf16.msra.mxu0 %v762
    %942 = vmatprep.subr.bf16.mxu0 %v759
    %943 = vmatpush2.bf16.msra.mxu0 %v758
    %944 = vmatprep.subr.bf16.mxu0 %v755
    %945 = vmatpush2.bf16.msra.mxu0 %v754
    %946 = vmatprep.mubr.bf16.mxu0 %v60
    %947 = vmatmul.mubr.bf16.gmra.mxu0 %v59
    %v948 = vpop.f32.mrf.mxu0
    %v949 = vadd.f32 %v387, %v948
    %v950 = vpop.f32.mrf.mxu0
    %v951 = vadd.f32 %v389, %v950
    %v952 = vpop.f32.mrf.mxu0
    %v953 = vpop.f32.mrf.mxu0
    %954 = vdwg.mxu0
    %955 = vmatprep.subr.bf16.mxu0 %v815
    %956 = vmatpush1.bf16.msra.mxu0 %v814
    %957 = vmatprep.subr.bf16.mxu0 %v811
    %958 = vmatpush1.bf16.msra.mxu0 %v810
    %959 = vmatprep.subr.bf16.mxu0 %v807
    %960 = vmatpush1.bf16.msra.mxu0 %v806
    %961 = vmatprep.subr.bf16.mxu0 %v803
    %962 = vmatpush1.bf16.msra.mxu0 %v802
    %963 = vmatprep.subr.bf16.mxu0 %v799
    %964 = vmatpush1.bf16.msra.mxu0 %v798
    %965 = vmatprep.subr.bf16.mxu0 %v795
    %966 = vmatpush1.bf16.msra.mxu0 %v794
    %967 = vmatprep.subr.bf16.mxu0 %v791
    %968 = vmatpush1.bf16.msra.mxu0 %v790
    %969 = vmatprep.subr.bf16.mxu0 %v787
    %970 = vmatpush1.bf16.msra.mxu0 %v786
    %971 = vmatprep.subr.bf16.mxu0 0
    %972 = vmatpush2.bf16.msra.mxu0 0
    %973 = vmatprep.subr.bf16.mxu0 0
    %974 = vmatpush2.bf16.msra.mxu0 0
    %975 = vmatprep.subr.bf16.mxu0 0
    %976 = vmatpush2.bf16.msra.mxu0 0
    %977 = vmatprep.subr.bf16.mxu0 0
    %978 = vmatpush2.bf16.msra.mxu0 0
    %979 = vmatprep.subr.bf16.mxu0 0
    %980 = vmatpush2.bf16.msra.mxu0 0
    %981 = vmatprep.subr.bf16.mxu0 0
    %982 = vmatpush2.bf16.msra.mxu0 0
    %983 = vmatprep.subr.bf16.mxu0 0
    %984 = vmatpush2.bf16.msra.mxu0 0
    %985 = vmatprep.subr.bf16.mxu0 0
    %986 = vmatpush2.bf16.msra.mxu0 0
    %987 = vmatprep.mubr.bf16.mxu0 0
    %988 = vmatmul.mubr.bf16.gmra.mxu0 %v61
    %v989 = vpop.f32.mrf.mxu0
    %v990 = vadd.f32 %v949, %v989
    %v991 = vpop.f32.mrf.mxu0
    %v992 = vadd.f32 %v951, %v991
    %v993 = vpop.f32.mrf.mxu0
    %v994 = vpop.f32.mrf.mxu0
    %995 = vdwg.mxu0
    %996 = vmatprep.subr.bf16.mxu0 %v753
    %997 = vmatpush1.bf16.msra.mxu0 %v752
    %998 = vmatprep.subr.bf16.mxu0 %v749
    %999 = vmatpush1.bf16.msra.mxu0 %v748
    %1000 = vmatprep.subr.bf16.mxu0 %v745
    %1001 = vmatpush1.bf16.msra.mxu0 %v744
    %1002 = vmatprep.subr.bf16.mxu0 %v741
    %1003 = vmatpush1.bf16.msra.mxu0 %v740
    %1004 = vmatprep.subr.bf16.mxu0 %v737
    %1005 = vmatpush1.bf16.msra.mxu0 %v736
    %1006 = vmatprep.subr.bf16.mxu0 %v733
    %1007 = vmatpush1.bf16.msra.mxu0 %v732
    %1008 = vmatprep.subr.bf16.mxu0 %v729
    %1009 = vmatpush1.bf16.msra.mxu0 %v728
    %1010 = vmatprep.subr.bf16.mxu0 %v725
    %1011 = vmatpush1.bf16.msra.mxu0 %v724
    %1012 = vmatprep.subr.bf16.mxu0 %v785
    %1013 = vmatpush2.bf16.msra.mxu0 %v784
    %1014 = vmatprep.subr.bf16.mxu0 %v781
    %1015 = vmatpush2.bf16.msra.mxu0 %v780
    %1016 = vmatprep.subr.bf16.mxu0 %v777
    %1017 = vmatpush2.bf16.msra.mxu0 %v776
    %1018 = vmatprep.subr.bf16.mxu0 %v773
    %1019 = vmatpush2.bf16.msra.mxu0 %v772
    %1020 = vmatprep.subr.bf16.mxu0 %v769
    %1021 = vmatpush2.bf16.msra.mxu0 %v768
    %1022 = vmatprep.subr.bf16.mxu0 %v765
    %1023 = vmatpush2.bf16.msra.mxu0 %v764
    %1024 = vmatprep.subr.bf16.mxu0 %v761
    %1025 = vmatpush2.bf16.msra.mxu0 %v760
    %1026 = vmatprep.subr.bf16.mxu0 %v757
    %1027 = vmatpush2.bf16.msra.mxu0 %v756
    %1028 = vmatprep.mubr.bf16.mxu0 %v60
    %1029 = vmatmul.mubr.bf16.gmra.mxu0 %v59
    %v1030 = vpop.f32.mrf.mxu0
    %v1031 = vadd.f32 %v428, %v1030
    %v1032 = vpop.f32.mrf.mxu0
    %v1033 = vadd.f32 %v430, %v1032
    %v1034 = vpop.f32.mrf.mxu0
    %v1035 = vpop.f32.mrf.mxu0
    %1036 = vdwg.mxu0
    %1037 = vmatprep.subr.bf16.mxu0 %v817
    %1038 = vmatpush1.bf16.msra.mxu0 %v816
    %1039 = vmatprep.subr.bf16.mxu0 %v813
    %1040 = vmatpush1.bf16.msra.mxu0 %v812
    %1041 = vmatprep.subr.bf16.mxu0 %v809
    %1042 = vmatpush1.bf16.msra.mxu0 %v808
    %1043 = vmatprep.subr.bf16.mxu0 %v805
    %1044 = vmatpush1.bf16.msra.mxu0 %v804
    %1045 = vmatprep.subr.bf16.mxu0 %v801
    %1046 = vmatpush1.bf16.msra.mxu0 %v800
    %1047 = vmatprep.subr.bf16.mxu0 %v797
    %1048 = vmatpush1.bf16.msra.mxu0 %v796
    %1049 = vmatprep.subr.bf16.mxu0 %v793
    %1050 = vmatpush1.bf16.msra.mxu0 %v792
    %1051 = vmatprep.subr.bf16.mxu0 %v789
    %1052 = vmatpush1.bf16.msra.mxu0 %v788
    %1053 = vmatprep.subr.bf16.mxu0 0
    %1054 = vmatpush2.bf16.msra.mxu0 0
    %1055 = vmatprep.subr.bf16.mxu0 0
    %1056 = vmatpush2.bf16.msra.mxu0 0
    %1057 = vmatprep.subr.bf16.mxu0 0
    %1058 = vmatpush2.bf16.msra.mxu0 0
    %1059 = vmatprep.subr.bf16.mxu0 0
    %1060 = vmatpush2.bf16.msra.mxu0 0
    %1061 = vmatprep.subr.bf16.mxu0 0
    %1062 = vmatpush2.bf16.msra.mxu0 0
    %1063 = vmatprep.subr.bf16.mxu0 0
    %1064 = vmatpush2.bf16.msra.mxu0 0
    %1065 = vmatprep.subr.bf16.mxu0 0
    %1066 = vmatpush2.bf16.msra.mxu0 0
    %1067 = vmatprep.subr.bf16.mxu0 0
    %1068 = vmatpush2.bf16.msra.mxu0 0
    %1069 = vmatprep.mubr.bf16.mxu0 0
    %1070 = vmatmul.mubr.bf16.gmra.mxu0 %v61
    %v1071 = vpop.f32.mrf.mxu0
    %v1072 = vadd.f32 %v1031, %v1071
    %v1073 = vpop.f32.mrf.mxu0
    %v1074 = vadd.f32 %v1033, %v1073
    %v1075 = vpop.f32.mrf.mxu0
    %v1076 = vpop.f32.mrf.mxu0
    %1077 = vdwg.mxu0
    %v1078 = vld [vmem:[%s4] sm:$0xf]
    %v1080 = vlaneseq
    %v1081 = vshrl.u32 %v1080, 7
    %v1082 = vsub.s32 0, %v1081
    %v1083 = vrot.slane %v1078, %v1082
    %v1084 = vlaneseq
    %v1085 = vshrl.u32 %v1084, 7
    %v1086 = vsub.s32 1, %v1085
    %v1087 = vrot.slane %v1078, %v1086
    %v1088 = vlaneseq
    %v1089 = vshrl.u32 %v1088, 7
    %v1090 = vsub.s32 2, %v1089
    %v1091 = vrot.slane %v1078, %v1090
    %v1092 = vlaneseq
    %v1093 = vshrl.u32 %v1092, 7
    %v1094 = vsub.s32 3, %v1093
    %v1095 = vrot.slane %v1078, %v1094
    %v1100 = vadd.f32 %v990, %v1083
    %v1101 = vadd.f32 %v992, %v1087
    %v1102 = vadd.f32 %v1072, %v1091
    %v1103 = vadd.f32 %v1074, %v1095
    %v1104 = vmul.f32 %v1100, 0.5
    %v1105 = vmul.f32 %v1101, 0.5
    %v1106 = vmul.f32 %v1102, 0.5
    %v1107 = vmul.f32 %v1103, 0.5
    %v1108 = vtanh.pop %v1104
    %v1109 = vtanh.pop %v1105
    %v1110 = vtanh.pop %v1106
    %v1111 = vtanh.pop %v1107
    %v1112 = vmul.f32 %v1108, 0.5
    %v1113 = vmul.f32 %v1109, 0.5
    %v1114 = vmul.f32 %v1110, 0.5
    %v1115 = vmul.f32 %v1111, 0.5
    %v1116 = vadd.f32 %v1112, 0.5
    %v1117 = vadd.f32 %v1113, 0.5
    %v1118 = vadd.f32 %v1114, 0.5
    %v1119 = vadd.f32 %v1115, 0.5
    %v1120 = vpack.c.bf16 %v1116, %v1116
    %v1121 = vpack.c.bf16 %v1117, %v1117
    %v1122 = vpack.c.bf16 %v1118, %v1118
    %v1123 = vpack.c.bf16 %v1119, %v1119
    %v1124 = vld [vmem:[%s5] sm:$0xf]
    %v1125 = vld [vmem:[%s5 + $0x4] sm:$0xf]
    %v1126 = vld [vmem:[%s5 + $0x8] sm:$0xf]
    %v1127 = vld [vmem:[%s5 + $0xc] sm:$0xf]
    %v1128 = vld [vmem:[%s5 + $0x10] sm:$0xf]
    %v1129 = vld [vmem:[%s5 + $0x14] sm:$0xf]
    %v1130 = vld [vmem:[%s5 + $0x18] sm:$0xf]
    %v1131 = vld [vmem:[%s5 + $0x1c] sm:$0xf]
    %v1132 = vld [vmem:[%s5 + $0x20] sm:$0xf]
    %v1133 = vld [vmem:[%s5 + $0x24] sm:$0xf]
    %v1134 = vld [vmem:[%s5 + $0x28] sm:$0xf]
    %v1135 = vld [vmem:[%s5 + $0x2c] sm:$0xf]
    %v1136 = vld [vmem:[%s5 + $0x30] sm:$0xf]
    %v1137 = vld [vmem:[%s5 + $0x34] sm:$0xf]
    %v1138 = vld [vmem:[%s5 + $0x38] sm:$0xf]
    %v1139 = vld [vmem:[%s5 + $0x3c] sm:$0xf]
    %v1140 = vld [vmem:[%s5 + $0x40] sm:$0xf]
    %v1141 = vld [vmem:[%s5 + $0x44] sm:$0xf]
    %v1142 = vld [vmem:[%s5 + $0x48] sm:$0xf]
    %v1143 = vld [vmem:[%s5 + $0x4c] sm:$0xf]
    %v1144 = vld [vmem:[%s5 + $0x50] sm:$0xf]
    %v1145 = vld [vmem:[%s5 + $0x54] sm:$0xf]
    %v1146 = vld [vmem:[%s5 + $0x58] sm:$0xf]
    %v1147 = vld [vmem:[%s5 + $0x5c] sm:$0xf]
    %v1148 = vld [vmem:[%s5 + $0x60] sm:$0xf]
    %v1149 = vld [vmem:[%s5 + $0x64] sm:$0xf]
    %v1150 = vld [vmem:[%s5 + $0x68] sm:$0xf]
    %v1151 = vld [vmem:[%s5 + $0x6c] sm:$0xf]
    %v1152 = vld [vmem:[%s5 + $0x70] sm:$0xf]
    %v1153 = vld [vmem:[%s5 + $0x74] sm:$0xf]
    %v1154 = vld [vmem:[%s5 + $0x78] sm:$0xf]
    %v1155 = vld [vmem:[%s5 + $0x7c] sm:$0xf]
    %v1156 = vld [vmem:[%s5 + $0x80] sm:$0xf]
    %v1157 = vld [vmem:[%s5 + $0x84] sm:$0xf]
    %v1158 = vld [vmem:[%s5 + $0x88] sm:$0xf]
    %v1159 = vld [vmem:[%s5 + $0x8c] sm:$0xf]
    %v1160 = vld [vmem:[%s5 + $0x90] sm:$0xf]
    %v1161 = vld [vmem:[%s5 + $0x94] sm:$0xf]
    %v1162 = vld [vmem:[%s5 + $0x98] sm:$0xf]
    %v1163 = vld [vmem:[%s5 + $0x9c] sm:$0xf]
    %v1164 = vld [vmem:[%s5 + $0xa0] sm:$0xf]
    %v1165 = vld [vmem:[%s5 + $0xa4] sm:$0xf]
    %v1166 = vld [vmem:[%s5 + $0xa8] sm:$0xf]
    %v1167 = vld [vmem:[%s5 + $0xac] sm:$0xf]
    %v1168 = vld [vmem:[%s5 + $0xb0] sm:$0xf]
    %v1169 = vld [vmem:[%s5 + $0xb4] sm:$0xf]
    %v1170 = vld [vmem:[%s5 + $0xb8] sm:$0xf]
    %v1171 = vld [vmem:[%s5 + $0xbc] sm:$0xf]
    %v1172 = vld [vmem:[%s5 + $0xc0] sm:$0xf]
    %v1173 = vld [vmem:[%s5 + $0xc4] sm:$0xf]
    %v1174 = vld [vmem:[%s5 + $0xc8] sm:$0xf]
    %v1175 = vld [vmem:[%s5 + $0xcc] sm:$0xf]
    %v1176 = vld [vmem:[%s5 + $0xd0] sm:$0xf]
    %v1177 = vld [vmem:[%s5 + $0xd4] sm:$0xf]
    %v1178 = vld [vmem:[%s5 + $0xd8] sm:$0xf]
    %v1179 = vld [vmem:[%s5 + $0xdc] sm:$0xf]
    %v1180 = vld [vmem:[%s5 + $0xe0] sm:$0xf]
    %v1181 = vld [vmem:[%s5 + $0xe4] sm:$0xf]
    %v1182 = vld [vmem:[%s5 + $0xe8] sm:$0xf]
    %v1183 = vld [vmem:[%s5 + $0xec] sm:$0xf]
    %v1184 = vld [vmem:[%s5 + $0xf0] sm:$0xf]
    %v1185 = vld [vmem:[%s5 + $0xf4] sm:$0xf]
    %v1186 = vld [vmem:[%s5 + $0xf8] sm:$0xf]
    %v1187 = vld [vmem:[%s5 + $0xfc] sm:$0xf]
    %v1188 = vld [vmem:[%s6] sm:$0x1]
    %v1253 = vunpack.c.l.b16 %v1124
    %v1254 = vunpack.c.l.b16 %v1125
    %v1255 = vunpack.c.l.b16 %v1126
    %v1256 = vunpack.c.l.b16 %v1127
    %v1257 = vunpack.c.l.b16 %v1128
    %v1258 = vunpack.c.l.b16 %v1129
    %v1259 = vunpack.c.l.b16 %v1130
    %v1260 = vunpack.c.l.b16 %v1131
    %v1261 = vunpack.c.l.b16 %v1132
    %v1262 = vunpack.c.l.b16 %v1133
    %v1263 = vunpack.c.l.b16 %v1134
    %v1264 = vunpack.c.l.b16 %v1135
    %v1265 = vunpack.c.l.b16 %v1136
    %v1266 = vunpack.c.l.b16 %v1137
    %v1267 = vunpack.c.l.b16 %v1138
    %v1268 = vunpack.c.l.b16 %v1139
    %v1269 = vunpack.c.l.b16 %v1140
    %v1270 = vunpack.c.l.b16 %v1141
    %v1271 = vunpack.c.l.b16 %v1142
    %v1272 = vunpack.c.l.b16 %v1143
    %v1273 = vunpack.c.l.b16 %v1144
    %v1274 = vunpack.c.l.b16 %v1145
    %v1275 = vunpack.c.l.b16 %v1146
    %v1276 = vunpack.c.l.b16 %v1147
    %v1277 = vunpack.c.l.b16 %v1148
    %v1278 = vunpack.c.l.b16 %v1149
    %v1279 = vunpack.c.l.b16 %v1150
    %v1280 = vunpack.c.l.b16 %v1151
    %v1281 = vunpack.c.l.b16 %v1152
    %v1282 = vunpack.c.l.b16 %v1153
    %v1283 = vunpack.c.l.b16 %v1154
    %v1284 = vunpack.c.l.b16 %v1155
    %v1285 = vunpack.c.l.b16 %v1156
    %v1286 = vunpack.c.l.b16 %v1157
    %v1287 = vunpack.c.l.b16 %v1158
    %v1288 = vunpack.c.l.b16 %v1159
    %v1289 = vunpack.c.l.b16 %v1160
    %v1290 = vunpack.c.l.b16 %v1161
    %v1291 = vunpack.c.l.b16 %v1162
    %v1292 = vunpack.c.l.b16 %v1163
    %v1293 = vunpack.c.l.b16 %v1164
    %v1294 = vunpack.c.l.b16 %v1165
    %v1295 = vunpack.c.l.b16 %v1166
    %v1296 = vunpack.c.l.b16 %v1167
    %v1297 = vunpack.c.l.b16 %v1168
    %v1298 = vunpack.c.l.b16 %v1169
    %v1299 = vunpack.c.l.b16 %v1170
    %v1300 = vunpack.c.l.b16 %v1171
    %v1301 = vunpack.c.l.b16 %v1172
    %v1302 = vunpack.c.l.b16 %v1173
    %v1303 = vunpack.c.l.b16 %v1174
    %v1304 = vunpack.c.l.b16 %v1175
    %v1305 = vunpack.c.l.b16 %v1176
    %v1306 = vunpack.c.l.b16 %v1177
    %v1307 = vunpack.c.l.b16 %v1178
    %v1308 = vunpack.c.l.b16 %v1179
    %v1309 = vunpack.c.l.b16 %v1180
    %v1310 = vunpack.c.l.b16 %v1181
    %v1311 = vunpack.c.l.b16 %v1182
    %v1312 = vunpack.c.l.b16 %v1183
    %v1313 = vunpack.c.l.b16 %v1184
    %v1314 = vunpack.c.l.b16 %v1185
    %v1315 = vunpack.c.l.b16 %v1186
    %v1316 = vunpack.c.l.b16 %v1187
    %v1317 = vpack.c.b16 %v1254, %v1253
    %v1318 = vpack.c.b16 %v1256, %v1255
    %v1319 = vpack.c.b16 %v1258, %v1257
    %v1320 = vpack.c.b16 %v1260, %v1259
    %v1321 = vpack.c.b16 %v1262, %v1261
    %v1322 = vpack.c.b16 %v1264, %v1263
    %v1323 = vpack.c.b16 %v1266, %v1265
    %v1324 = vpack.c.b16 %v1268, %v1267
    %v1325 = vpack.c.b16 %v1270, %v1269
    %v1326 = vpack.c.b16 %v1272, %v1271
    %v1327 = vpack.c.b16 %v1274, %v1273
    %v1328 = vpack.c.b16 %v1276, %v1275
    %v1329 = vpack.c.b16 %v1278, %v1277
    %v1330 = vpack.c.b16 %v1280, %v1279
    %v1331 = vpack.c.b16 %v1282, %v1281
    %v1332 = vpack.c.b16 %v1284, %v1283
    %v1333 = vpack.c.b16 %v1286, %v1285
    %v1334 = vpack.c.b16 %v1288, %v1287
    %v1335 = vpack.c.b16 %v1290, %v1289
    %v1336 = vpack.c.b16 %v1292, %v1291
    %v1337 = vpack.c.b16 %v1294, %v1293
    %v1338 = vpack.c.b16 %v1296, %v1295
    %v1339 = vpack.c.b16 %v1298, %v1297
    %v1340 = vpack.c.b16 %v1300, %v1299
    %v1341 = vpack.c.b16 %v1302, %v1301
    %v1342 = vpack.c.b16 %v1304, %v1303
    %v1343 = vpack.c.b16 %v1306, %v1305
    %v1344 = vpack.c.b16 %v1308, %v1307
    %v1345 = vpack.c.b16 %v1310, %v1309
    %v1346 = vpack.c.b16 %v1312, %v1311
    %v1347 = vpack.c.b16 %v1314, %v1313
    %v1348 = vpack.c.b16 %v1316, %v1315
    %1381 = vmatprep.subr.bf16.mxu0 0
    %1382 = vmatpush1.bf16.msra.mxu0 %v1324
    %1383 = vmatprep.subr.bf16.mxu0 0
    %1384 = vmatpush1.bf16.msra.mxu0 %v1323
    %1385 = vmatprep.subr.bf16.mxu0 0
    %1386 = vmatpush1.bf16.msra.mxu0 %v1322
    %1387 = vmatprep.subr.bf16.mxu0 0
    %1388 = vmatpush1.bf16.msra.mxu0 %v1321
    %1389 = vmatprep.subr.bf16.mxu0 0
    %1390 = vmatpush1.bf16.msra.mxu0 %v1320
    %1391 = vmatprep.subr.bf16.mxu0 0
    %1392 = vmatpush1.bf16.msra.mxu0 %v1319
    %1393 = vmatprep.subr.bf16.mxu0 0
    %1394 = vmatpush1.bf16.msra.mxu0 %v1318
    %1395 = vmatprep.subr.bf16.mxu0 0
    %1396 = vmatpush1.bf16.msra.mxu0 %v1317
    %1397 = vmatprep.subr.bf16.mxu0 0
    %1398 = vmatpush2.bf16.msra.mxu0 %v1332
    %1399 = vmatprep.subr.bf16.mxu0 0
    %1400 = vmatpush2.bf16.msra.mxu0 %v1331
    %1401 = vmatprep.subr.bf16.mxu0 0
    %1402 = vmatpush2.bf16.msra.mxu0 %v1330
    %1403 = vmatprep.subr.bf16.mxu0 0
    %1404 = vmatpush2.bf16.msra.mxu0 %v1329
    %1405 = vmatprep.subr.bf16.mxu0 0
    %1406 = vmatpush2.bf16.msra.mxu0 %v1328
    %1407 = vmatprep.subr.bf16.mxu0 0
    %1408 = vmatpush2.bf16.msra.mxu0 %v1327
    %1409 = vmatprep.subr.bf16.mxu0 0
    %1410 = vmatpush2.bf16.msra.mxu0 %v1326
    %1411 = vmatprep.subr.bf16.mxu0 0
    %1412 = vmatpush2.bf16.msra.mxu0 %v1325
    %1413 = vmatprep.mubr.bf16.mxu0 %v1121
    %1414 = vmatmul.mubr.bf16.gmra.mxu0 %v1120
    %v1415 = vpop.f32.mrf.mxu0
    %v1416 = vadd.f32 %v1188, %v1415
    %v1417 = vpop.f32.mrf.mxu0
    %v1418 = vpop.f32.mrf.mxu0
    %v1419 = vpop.f32.mrf.mxu0
    %1420 = vdwg.mxu0
    %1421 = vmatprep.subr.bf16.mxu0 0
    %1422 = vmatpush1.bf16.msra.mxu0 %v1340
    %1423 = vmatprep.subr.bf16.mxu0 0
    %1424 = vmatpush1.bf16.msra.mxu0 %v1339
    %1425 = vmatprep.subr.bf16.mxu0 0
    %1426 = vmatpush1.bf16.msra.mxu0 %v1338
    %1427 = vmatprep.subr.bf16.mxu0 0
    %1428 = vmatpush1.bf16.msra.mxu0 %v1337
    %1429 = vmatprep.subr.bf16.mxu0 0
    %1430 = vmatpush1.bf16.msra.mxu0 %v1336
    %1431 = vmatprep.subr.bf16.mxu0 0
    %1432 = vmatpush1.bf16.msra.mxu0 %v1335
    %1433 = vmatprep.subr.bf16.mxu0 0
    %1434 = vmatpush1.bf16.msra.mxu0 %v1334
    %1435 = vmatprep.subr.bf16.mxu0 0
    %1436 = vmatpush1.bf16.msra.mxu0 %v1333
    %1437 = vmatprep.subr.bf16.mxu0 0
    %1438 = vmatpush2.bf16.msra.mxu0 %v1348
    %1439 = vmatprep.subr.bf16.mxu0 0
    %1440 = vmatpush2.bf16.msra.mxu0 %v1347
    %1441 = vmatprep.subr.bf16.mxu0 0
    %1442 = vmatpush2.bf16.msra.mxu0 %v1346
    %1443 = vmatprep.subr.bf16.mxu0 0
    %1444 = vmatpush2.bf16.msra.mxu0 %v1345
    %1445 = vmatprep.subr.bf16.mxu0 0
    %1446 = vmatpush2.bf16.msra.mxu0 %v1344
    %1447 = vmatprep.subr.bf16.mxu0 0
    %1448 = vmatpush2.bf16.msra.mxu0 %v1343
    %1449 = vmatprep.subr.bf16.mxu0 0
    %1450 = vmatpush2.bf16.msra.mxu0 %v1342
    %1451 = vmatprep.subr.bf16.mxu0 0
    %1452 = vmatpush2.bf16.msra.mxu0 %v1341
    %1453 = vmatprep.mubr.bf16.mxu0 %v1123
    %1454 = vmatmul.mubr.bf16.gmra.mxu0 %v1122
    %v1455 = vpop.f32.mrf.mxu0
    %v1456 = vadd.f32 %v1416, %v1455
    %v1457 = vpop.f32.mrf.mxu0
    %v1458 = vpop.f32.mrf.mxu0
    %v1459 = vpop.f32.mrf.mxu0
    %1460 = vdwg.mxu0
    %v1461 = vmul.f32 %v1456, 0.5
    %v1462 = vtanh.pop %v1461
    %v1463 = vmul.f32 %v1462, 0.5
    %v1464 = vadd.f32 %v1463, 0.5
    %1466 = vrot.lane.b32.xlu0 %v1456, 64
    %v1467 = vpop.permute.xlu0 %1466
    %vm1469 = vcmask 523264
    %v1470 = vsel %vm1469, %v1464, %v1467
    %1471 = vst [vmem:[#allocation5] sm:$0x1] %v1470
    // Predicated region
    $region34: #{tpu_custom_call.1} parent=1 // pred_check
      _
    $region35: #{tpu_custom_call.1} parent=1 // pred_check_branch
      %1473 = sbr.rel (0) target = $region37
    $region36: #{tpu_custom_call.1} parent=1 // pred_region
      %s1475 = ssub.s32 16, 16
      %1476 = vsyncadd [#allocation4], %s1475
      %s1478 = sshll.u32 [#allocation5], 4
      %s1479 = int_to_ptr.vmem [resolvable:$true] %s1478
      %1481 = dma.vmem_to_hbm [thread:$0]  %s1479, 16, %s7, [#allocation4]
    $region37: #{tpu_custom_call.1} parent=1 // pred_fallthru
      _
    // Predicated region
    $region38: #{tpu_custom_call.1} parent=1 // pred_check
      _
    $region39: #{tpu_custom_call.1} parent=1 // pred_check_branch
      %1483 = sbr.rel (0) target = $region41
    $region40: #{tpu_custom_call.1} parent=1 // pred_region
      %1484 = dma.done [#allocation4], 16
    $region41: #{tpu_custom_call.1} parent=1 // pred_fallthru
      _
    %1485 = vsyncpa [#allocation3], 1
    %1486 = vsyncpa [#allocation4], 1

</llo_original>
